<compile_context>
chip_gen: v7x
topology: tpu7x:2x2x1
jax: 0.10.0
libtpu: 0.0.40
codegen_flags: <defaults>
</compile_context>

<pallas_src>
import jax
import jax.numpy as jnp
from jax.experimental import pallas as pl
from jax.experimental.pallas import tpu as pltpu

LEAKY_SLOPE = 0.01  # torch.nn.LeakyReLU default negative_slope


def _round_up(x, m):
    return ((x + m - 1) // m) * m


# ---------------------------------------------------------------------------
# Kernels
# ---------------------------------------------------------------------------

def _sentence_embedding_kernel(x_ref, w_ref, b_ref, m_ref, o_ref):
    """Whole-reduction kernel: (tm, h_in) @ (h_in, Np) + bias + LeakyReLU + mask."""
    y = jnp.dot(x_ref[...], w_ref[...], preferred_element_type=jnp.float32)
    y = y + b_ref[...]                          # (1, Np) bias broadcast, f32
    y = jnp.where(y > 0, y, LEAKY_SLOPE * y)    # LeakyReLU
    y = y * m_ref[...]                          # exact {0,1} per-row keep mask
    o_ref[...] = y.astype(o_ref.dtype)


def _sentence_embedding_kernel_ktiled(x_ref, w_ref, b_ref, m_ref, o_ref, acc_ref):
    """K-tiled fallback: accumulate partial products in an f32 VMEM scratch."""
    k = pl.program_id(1)

    @pl.when(k == 0)
    def _():
        acc_ref[...] = jnp.zeros_like(acc_ref)

    acc_ref[...] += jnp.dot(x_ref[...], w_ref[...],
                            preferred_element_type=jnp.float32)

    @pl.when(k == pl.num_programs(1) - 1)
    def _():
        y = acc_ref[...] + b_ref[...]
        y = jnp.where(y > 0, y, LEAKY_SLOPE * y)
        y = y * m_ref[...]
        o_ref[...] = y.astype(o_ref.dtype)


# ---------------------------------------------------------------------------
# Hardware queries / tiling
# ---------------------------------------------------------------------------

def _device_kind():
    try:
        return jax.devices()[0].device_kind.lower()
    except Exception:
        return ""


def _vmem_capacity_bytes():
    try:
        cap = int(pltpu.get_tpu_info().vmem_capacity_bytes)
        if cap > 0:
            return cap
    except Exception:
        pass
    return 64 << 20  # conservative fallback: smallest-VMEM generation (v7x)


def _select_tiles(M, h_in, Np, in_itemsize, out_itemsize, budget, tm_req):
    """Pick (tm, tk). tk >= h_in means 'no K tiling' (whole weight resident)."""
    M8 = _round_up(max(M, 1), 8)

    def footprint(tm_, tk_):
        x_t = tm_ * tk_ * in_itemsize
        w_t = tk_ * Np * in_itemsize
        b_t = Np * 4
        m_t = tm_ * 4
        o_t = tm_ * Np * out_itemsize
        acc = tm_ * Np * 4 if tk_ < h_in else 0   # f32 accumulator (single buffer)
        return 2 * (x_t + w_t + b_t + m_t + o_t) + acc  # x2: double buffering

    # Row-tile cap: never exceed the (8-rounded) row count, and keep >= 2 row
    # tiles so the v7x megacore "parallel" axis has work for both TensorCores
    # (negligible cost on single-core chips).
    if M <= 8:
        tm_cap = M                     # block row dim == full array dim (always legal)
    else:
        tm_cap = max(8, min(_round_up(tm_req, 8), M8 - 8))

    # 1) Preferred: whole weight resident (constant block index -> DMA'd once).
    tm = tm_cap
    while footprint(tm, h_in) > budget and tm > 256:
        tm = _round_up(max(256, tm // 2), 256)   # MXU-friendly 256-multiples
    while footprint(tm, h_in) > budget and tm > 8:
        tm = _round_up(max(8, tm // 2), 8)
    if footprint(tm, h_in) <= budget:
        return tm, h_in, footprint(tm, h_in)

    # 2) Fallback for very large h_in: K-tile the reduction.
    tm = tm_cap
    tk = _round_up(h_in, 128)
    while footprint(tm, tk) > budget and tk > 512:
        tk = _round_up(max(512, tk // 2), 512)
    while footprint(tm, tk) > budget and tm > 256:
        tm = _round_up(max(256, tm // 2), 256)
    while footprint(tm, tk) > budget and tk > 128:
        tk = _round_up(max(128, tk // 2), 128)
    while footprint(tm, tk) > budget and tm > 8:
        tm = _round_up(max(8, tm // 2), 8)
    return tm, tk, footprint(tm, tk)


# ---------------------------------------------------------------------------
# Forward wrapper
# ---------------------------------------------------------------------------

def sentence_embedding_forward(x, mask_nonzero, weight, bias, *,
                               tm=2048, matmul_dtype="auto", out_dtype=None,
                               vmem_budget_bytes=None):
    """Forward pass of `sentence_embedding`.

    x:            (B, S, h_in)
    mask_nonzero: (batch_idx, row_idx) integer arrays of "kept" positions
    weight:       (h_in, h_out)  (transposed w.r.t. torch nn.Linear storage)
    bias:         (h_out,)
    matmul_dtype: MXU-input dtype; "auto" = bf16 on v5e, x.dtype elsewhere;
                  None = x.dtype.  Accumulation/epilogue always f32.
    out_dtype:    output store dtype (defaults to x.dtype).
    """
    B, S, h_in = x.shape
    h_out = weight.shape[1]
    M = B * S

    out_dtype = jnp.dtype(x.dtype if out_dtype is None else out_dtype)
    if isinstance(matmul_dtype, str) and matmul_dtype == "auto":
        kind = _device_kind()
        is_v5e = ("v5e" in kind) or ("v5 lite" in kind) or ("v5litepod" in kind)
        matmul_dtype = jnp.bfloat16 if is_v5e else x.dtype
    elif matmul_dtype is None:
        matmul_dtype = x.dtype
    matmul_dtype = jnp.dtype(matmul_dtype)
    in_itemsize = matmul_dtype.itemsize
    out_itemsize = out_dtype.itemsize

    # {0,1} keep mask from the (batch, row) index lists (small scatter; duplicate
    # indices are idempotent under .set(1.0)).
    batch_idx, row_idx = mask_nonzero
    keep = jnp.zeros((B, S), dtype=jnp.float32).at[batch_idx, row_idx].set(1.0)
    keep = keep.reshape(M, 1)

    # Lane-dense output width (unmasked full-lane `vst`).
    Np = _round_up(h_out, 128)

    # Per-generation VMEM budget: ~3/4 of physical (48 MiB v7x, 96 MiB v5e/v6e).
    cap = _vmem_capacity_bytes()
    budget = vmem_budget_bytes if vmem_budget_bytes is not None else (cap * 3) // 4

    tm_eff, tk_eff, fp_bytes = _select_tiles(
        M, h_in, Np, in_itemsize, out_itemsize, budget, tm)
    use_k = tk_eff < h_in

    # Operand prep.  x: reshape only (no row padding); cast only if a narrower
    # MXU dtype was requested.  Weight/bias: small zero-pad along N up to Np
    # (zero columns -> zero outputs, trimmed after the kernel).
    x2 = x.reshape(M, h_in)
    w2 = weight
    if matmul_dtype != x.dtype:
        x2 = x2.astype(matmul_dtype)
    if matmul_dtype != weight.dtype:
        w2 = w2.astype(matmul_dtype)
    if Np != h_out:
        w2 = jnp.pad(w2, ((0, 0), (0, Np - h_out)))
    b2 = bias.astype(jnp.float32)
    if Np != h_out:
        b2 = jnp.pad(b2, (0, Np - h_out))
    b2 = b2.reshape(1, Np)

    num_row_tiles = pl.cdiv(M, tm_eff)
    cost = pl.CostEstimate(
        flops=2 * M * h_in * Np,
        transcendentals=0,
        bytes_accessed=(M * h_in * in_itemsize + h_in * Np * in_itemsize
                        + Np * 4 + M * 4 + M * Np * out_itemsize))
    vmem_limit = int(min(cap, max(32 << 20, fp_bytes + (4 << 20))))

    if not use_k:
        grid_spec = pltpu.PrefetchScalarGridSpec(
            num_scalar_prefetch=0,
            grid=(num_row_tiles,),
            in_specs=[
                pl.BlockSpec((tm_eff, h_in), lambda i: (i, 0)),
                # Constant block index: the whole weight is DMA'd once and stays
                # resident in VMEM across all row tiles.
                pl.BlockSpec((h_in, Np), lambda i: (0, 0)),
                pl.BlockSpec((1, Np), lambda i: (0, 0)),
                pl.BlockSpec((tm_eff, 1), lambda i: (i, 0)),
            ],
            out_specs=pl.BlockSpec((tm_eff, Np), lambda i: (i, 0)),
        )
        kernel = _sentence_embedding_kernel
        dim_sem = ("parallel",)
    else:
        # Rare fallback for very large h_in.  The reduction axis is explicitly
        # zero-padded so partial K blocks never feed garbage into the
        # accumulator (the accumulation is NOT row-local across K).
        Kp = _round_up(h_in, tk_eff)
        if Kp != h_in:
            x2 = jnp.pad(x2, ((0, 0), (0, Kp - h_in)))
            w2 = jnp.pad(w2, ((0, Kp - h_in), (0, 0)))
        grid_spec = pltpu.PrefetchScalarGridSpec(
            num_scalar_prefetch=0,
            grid=(num_row_tiles, Kp // tk_eff),
            in_specs=[
                pl.BlockSpec((tm_eff, tk_eff), lambda i, k: (i, k)),
                pl.BlockSpec((tk_eff, Np), lambda i, k: (k, 0)),
                pl.BlockSpec((1, Np), lambda i, k: (0, 0)),
                pl.BlockSpec((tm_eff, 1), lambda i, k: (i, 0)),
            ],
            out_specs=pl.BlockSpec((tm_eff, Np), lambda i, k: (i, 0)),
            scratch_shapes=[pltpu.VMEM((tm_eff, Np), jnp.float32)],
        )
        kernel = _sentence_embedding_kernel_ktiled
        dim_sem = ("parallel", "arbitrary")

    out = pl.pallas_call(
        kernel,
        out_shape=jax.ShapeDtypeStruct((M, Np), out_dtype),
        grid_spec=grid_spec,
        compiler_params=pltpu.CompilerParams(
            dimension_semantics=dim_sem,
            vmem_limit_bytes=vmem_limit,
        ),
        cost_estimate=cost,
    )(x2, w2, b2, keep)

    if Np != h_out:
        out = out[:, :h_out]          # lane trim only; no strided row slice
    return out.reshape(B, S, h_out)


def _reference(x, mask_nonzero, weight, bias):
    """Pure-JAX reproduction of the torch forward for verification."""
    y = jnp.einsum("bsi,io->bso", x, weight, precision="highest") + bias
    batch_idx, row_idx = mask_nonzero
    m = y.at[batch_idx, row_idx, :].set(0.0)
    z = y - m
    return jnp.where(z > 0, z, LEAKY_SLOPE * z)


if __name__ == "__main__":
    key = jax.random.PRNGKey(0)
    kx, kw, kb, kx2, kw2, kb2 = jax.random.split(key, 6)

    # mask_nonzero: "non-padding" positions as (batch, row) index arrays,
    # e.g. first 6 tokens of sample 0 and first 4 tokens of sample 1.
    batch_idx = jnp.array([0, 0, 0, 0, 0, 0, 1, 1, 1, 1], dtype=jnp.int32)
    row_idx = jnp.array([0, 1, 2, 3, 4, 5, 0, 1, 2, 3], dtype=jnp.int32)
    mask_nonzero = (batch_idx, row_idx)

    # --- Case 1: main (weight-resident, 1-D grid) path ------------------------
    B, S, h_in, h_out = 2, 8, 32, 32
    x = jax.random.normal(kx, (B, S, h_in), dtype=jnp.float32)
    bound = 1.0 / (h_in ** 0.5)
    weight = jax.random.uniform(kw, (h_in, h_out), jnp.float32, -bound, bound)
    bias = jax.random.uniform(kb, (h_out,), jnp.float32, -bound, bound)

    ref = _reference(x, mask_nonzero, weight, bias)

    # Explicit f32 MXU path: tight tolerance.
    out = sentence_embedding_forward(x, mask_nonzero, weight, bias,
                                     matmul_dtype=jnp.float32)
    out = jax.block_until_ready(out)
    assert out.shape == (B, S, h_out)
    assert jnp.allclose(out, ref, atol=1e-5, rtol=1e-5)

    # Default ("auto") path: bf16 MXU inputs on v5e, f32 elsewhere.
    out_auto = jax.block_until_ready(
        sentence_embedding_forward(x, mask_nonzero, weight, bias))
    assert out_auto.shape == (B, S, h_out)
    assert jnp.allclose(out_auto, ref, atol=2e-2, rtol=2e-2)

    # Explicit bf16-MXU path (halved x/W HBM traffic; f32 accumulate/epilogue).
    out_bf16 = jax.block_until_ready(
        sentence_embedding_forward(x, mask_nonzero, weight, bias,
                                   matmul_dtype=jnp.bfloat16))
    assert jnp.allclose(out_bf16, ref, atol=2e-2, rtol=2e-2)

    # --- Case 2: force the K-tiled fallback with a tiny VMEM budget -----------
    B2, S2, h_in2, h_out2 = 2, 8, 256, 96
    x_k = jax.random.normal(kx2, (B2, S2, h_in2), dtype=jnp.float32)
    bound2 = 1.0 / (h_in2 ** 0.5)
    weight_k = jax.random.uniform(kw2, (h_in2, h_out2), jnp.float32, -bound2, bound2)
    bias_k = jax.random.uniform(kb2, (h_out2,), jnp.float32, -bound2, bound2)
    ref_k = _reference(x_k, mask_nonzero, weight_k, bias_k)

    out_k = sentence_embedding_forward(
        x_k, mask_nonzero, weight_k, bias_k,
        matmul_dtype=jnp.float32, vmem_budget_bytes=256 << 10)
    out_k = jax.block_until_ready(out_k)
    assert out_k.shape == (B2, S2, h_out2)
    assert jnp.allclose(out_k, ref_k, atol=1e-4, rtol=1e-4)

    print("KERNEL_OK")
</pallas_src>

<mosaic_0001>
module attributes {stable_mosaic.version = 11 : i64} {
  func.func @_sentence_embedding_kernel(%arg0: i32, %arg1: memref<8x32xf32, #tpu.memory_space<vmem>>, %arg2: memref<32x128xf32, #tpu.memory_space<vmem>>, %arg3: memref<1x128xf32, #tpu.memory_space<vmem>>, %arg4: memref<8x1xf32, #tpu.memory_space<vmem>>, %arg5: memref<8x128xf32, #tpu.memory_space<vmem>>) attributes {dimension_semantics = [#tpu.dimension_semantics<parallel>], iteration_bounds = array<i64: 2>, scalar_prefetch = 0 : i64, scratch_operands = 0 : i64, tpu.core_type = #tpu.core_type<tc>, window_params = [{transform_indices = @transform_0, window_bounds = array<i64: 8, 32>}, {pipeline_mode = #tpu.pipeline_mode<synchronous>, transform_indices = @transform_1, window_bounds = array<i64: 32, 128>}, {pipeline_mode = #tpu.pipeline_mode<synchronous>, transform_indices = @transform_2, window_bounds = array<i64: 1, 128>}, {transform_indices = @transform_3, window_bounds = array<i64: 8, 1>}, {transform_indices = @transform_4, window_bounds = array<i64: 8, 128>}]} {
    %c0 = arith.constant 0 : index
    %c0_0 = arith.constant 0 : index
    %0 = vector.load %arg1[%c0, %c0_0] : memref<8x32xf32, #tpu.memory_space<vmem>>, vector<8x32xf32>
    %c0_1 = arith.constant 0 : index
    %c0_2 = arith.constant 0 : index
    %1 = vector.load %arg2[%c0_1, %c0_2] : memref<32x128xf32, #tpu.memory_space<vmem>>, vector<32x128xf32>
    %cst = arith.constant dense<0.000000e+00> : vector<8x128xf32>
    %2 = tpu.matmul %0, %1, %cst {dimension_numbers = #tpu.dot_dimension_numbers<[1], [0], [0], [1], [0, 0, 1, 1], [], []>} : vector<8x32xf32>, vector<32x128xf32>, vector<8x128xf32> -> vector<8x128xf32>
    %c0_3 = arith.constant 0 : index
    %c0_4 = arith.constant 0 : index
    %3 = vector.load %arg3[%c0_3, %c0_4] : memref<1x128xf32, #tpu.memory_space<vmem>>, vector<1x128xf32>
    %4 = vector.broadcast %3 : vector<1x128xf32> to vector<8x128xf32>
    %5 = arith.addf %2, %4 : vector<8x128xf32>
    %cst_5 = arith.constant 0.000000e+00 : f32
    %6 = vector.broadcast %cst_5 : f32 to vector<8x128xf32>
    %7 = arith.cmpf ogt, %5, %6 : vector<8x128xf32>
    %cst_6 = arith.constant 0.00999999977 : f32
    %8 = vector.broadcast %cst_6 : f32 to vector<8x128xf32>
    %9 = arith.mulf %8, %5 : vector<8x128xf32>
    %10 = arith.select %7, %5, %9 : vector<8x128xi1>, vector<8x128xf32>
    %c0_7 = arith.constant 0 : index
    %c0_8 = arith.constant 0 : index
    %11 = vector.load %arg4[%c0_7, %c0_8] : memref<8x1xf32, #tpu.memory_space<vmem>>, vector<8x1xf32>
    %12 = vector.broadcast %11 : vector<8x1xf32> to vector<8x128xf32>
    %13 = arith.mulf %10, %12 : vector<8x128xf32>
    %c0_9 = arith.constant 0 : index
    %c0_10 = arith.constant 0 : index
    %14 = vector.load %arg5[%c0_9, %c0_10] : memref<8x128xf32, #tpu.memory_space<vmem>>, vector<8x128xf32>
    tpu.vector_store %arg5[%c0_9, %c0_10], %13 {strides = array<i32>} : memref<8x128xf32, #tpu.memory_space<vmem>>, vector<8x128xf32>,
    return
  }
  func.func @transform_0(%arg0: i32) -> (i32, i32) {
    %c0_i32 = arith.constant 0 : i32
    %c0_i32_0 = arith.constant 0 : i32
    return %arg0, %c0_i32 : i32, i32
  }
  func.func @transform_1(%arg0: i32) -> (i32, i32) {
    %c0_i32 = arith.constant 0 : i32
    %c0_i32_0 = arith.constant 0 : i32
    %c0_i32_1 = arith.constant 0 : i32
    return %c0_i32, %c0_i32_0 : i32, i32
  }
  func.func @transform_2(%arg0: i32) -> (i32, i32) {
    %c0_i32 = arith.constant 0 : i32
    %c0_i32_0 = arith.constant 0 : i32
    %c0_i32_1 = arith.constant 0 : i32
    return %c0_i32, %c0_i32_0 : i32, i32
  }
  func.func @transform_3(%arg0: i32) -> (i32, i32) {
    %c0_i32 = arith.constant 0 : i32
    %c0_i32_0 = arith.constant 0 : i32
    return %arg0, %c0_i32 : i32, i32
  }
  func.func @transform_4(%arg0: i32) -> (i32, i32) {
    %c0_i32 = arith.constant 0 : i32
    %c0_i32_0 = arith.constant 0 : i32
    return %arg0, %c0_i32 : i32, i32
  }
}

</mosaic_0001>

<llo_original>
// kernel: tpu_custom_call.1
$region0: #{tpu_custom_call.1}
  #allocation0 [shape = 'u32[]', space=smem, size = 0x4, offset = 0x4, fixed_abs, tag = 'smem constant byte address 0x4 - core index']
  #allocation1 [shape = 'u32[144,128]{1,0:T(1,128)}', space=vmem, size = 0x12000, scoped, tag = 'internal scratch']
  %s0 = inlined_call_operand.vmem [shape: f32[16,32], index: 0, kind: input, shape index: {}]
  %s1 = inlined_call_operand.hbm [shape: f32[32,128], index: 1, kind: input, shape index: {}]
  %s2 = inlined_call_operand.vmem [shape: f32[1,128], index: 2, kind: input, shape index: {}]
  %s3 = inlined_call_operand.vmem [shape: f32[16,1], index: 3, kind: input, shape index: {}]
  %s4 = inlined_call_operand.hbm [shape: f32[16,128], index: 4, kind: output, shape index: {}]
  %s5 = sld [smem:[#allocation0]]
  $region53: #{tpu_custom_call.1} parent=0
    _
  %s7 = ssub.s32 1, %s5
  %s8 = scalar_select 0, %s7, %s5
  $region1: #{tpu_custom_call.1} parent=0
    #allocation2 [shape = 'u8[16384]{0}', space=vmem, size = 0x4000, scoped, tag = 'input window, operand 1, single buffered']
    #allocation3 [shape = 's32[2]{0}', space=sflag, size = 0x8, scoped, tag = 'scoped memory for tpu_custom_call.1']
    #allocation4 [shape = 's32[2]{0}', space=sflag, size = 0x8, scoped, tag = 'scoped memory for tpu_custom_call.1']
    #allocation5 [shape = 'u8[8192]{0}', space=vmem, size = 0x2000, scoped, tag = 'output window, operand 0']
    %9 = vsyncpa [#allocation3], 0
    %10 = vsyncpa [#allocation4], 0
    %s11 = scalar_lea.sflag [#allocation4], 1
    %12 = vsyncpa %s11, 0
    loop: start=0, step=1, limit=4
    $region2: #{tpu_custom_call.1} parent=1 // loop_pre_header
      _
    $region3: #{tpu_custom_call.1} parent=1 // loop_header
      %s14 = sphi 0, %s18
      %p15 = scmp.ge.s32.totalorder %s14, 4
      %s24 = sphi 0, %s26
      %s27 = sphi 0, %s24
      %s28 = sphi 0, %s27
      %s44 = sphi 0, %s28
      %s48 = sphi 0, %s48
      %s50 = sphi 0, %s48
      %s51 = sphi 0, %s50
      %s65 = sphi 0, %s51
      %s69 = sphi 0, %s69
      %s71 = sphi 0, %s69
      %s72 = sphi 0, %s71
      %s86 = sphi 0, %s72
      %s92 = sphi 0, %s94
      %s95 = sphi 0, %s92
      %s96 = sphi 0, %s95
      %s112 = sphi 0, %s96
      %s118 = sphi 0, %s120
      %s121 = sphi 0, %s118
      %s122 = sphi 0, %s121
      %s138 = sphi 0, %s122
    $region4: #{tpu_custom_call.1} parent=1 // loop_header_branch
      %17 = sbr.rel (%p15) target = $region8
    $region5: #{tpu_custom_call.1} parent=1 // loop_body
      %s19 = ssub.s32 %s14, 1
      %s20 = ssub.s32 %s14, 2
      %s21 = sadd.s32 %s14, 1
      %s22 = ssub.s32 %s14, %s21
      %p23 = scmp.eq.s32.totalorder %s22, 0
      %s25 = sadd.s32 %s24, 1
      %s26 = scalar_select %p23, %s24, %s25
      %p29 = pneg %p23
      %p30 = scmp.eq.s32.totalorder %s14, 1
      %p31 = por %p29, %p30
      %p32 = scmp.ne.s32.totalorder %s24, %s27
      %p33 = scmp.eq.s32.totalorder %s14, 0
      %p34 = por %p32, %p33
      %p35 = scmp.ne.s32.totalorder %s24, %s27
      %p36 = scmp.eq.s32.totalorder %s19, 1
      %p37 = por %p35, %p36
      %p38 = scmp.ne.s32.totalorder %s27, %s28
      %p39 = scmp.eq.s32.totalorder %s19, 0
      %p40 = por %p38, %p39
      %p41 = scmp.ne.s32.totalorder %s27, %s28
      %p42 = scmp.eq.s32.totalorder %s20, 1
      %p43 = por %p41, %p42
      %p45 = scmp.ne.s32.totalorder %s28, %s44
      %p46 = scmp.eq.s32.totalorder %s20, 0
      %p47 = por %p45, %p46
      %s49 = sadd.s32 %s48, 1
      %p52 = scmp.eq.s32.totalorder %s14, 1
      %p53 = scmp.ne.s32.totalorder %s48, %s50
      %p54 = scmp.eq.s32.totalorder %s14, 0
      %p55 = por %p53, %p54
      %p56 = scmp.ne.s32.totalorder %s48, %s50
      %p57 = scmp.eq.s32.totalorder %s19, 1
      %p58 = por %p56, %p57
      %p59 = scmp.ne.s32.totalorder %s50, %s51
      %p60 = scmp.eq.s32.totalorder %s19, 0
      %p61 = por %p59, %p60
      %p62 = scmp.ne.s32.totalorder %s50, %s51
      %p63 = scmp.eq.s32.totalorder %s20, 1
      %p64 = por %p62, %p63
      %p66 = scmp.ne.s32.totalorder %s51, %s65
      %p67 = scmp.eq.s32.totalorder %s20, 0
      %p68 = por %p66, %p67
      %s70 = sadd.s32 %s69, 1
      %p73 = scmp.eq.s32.totalorder %s14, 1
      %p74 = scmp.ne.s32.totalorder %s69, %s71
      %p75 = scmp.eq.s32.totalorder %s14, 0
      %p76 = por %p74, %p75
      %p77 = scmp.ne.s32.totalorder %s69, %s71
      %p78 = scmp.eq.s32.totalorder %s19, 1
      %p79 = por %p77, %p78
      %p80 = scmp.ne.s32.totalorder %s71, %s72
      %p81 = scmp.eq.s32.totalorder %s19, 0
      %p82 = por %p80, %p81
      %p83 = scmp.ne.s32.totalorder %s71, %s72
      %p84 = scmp.eq.s32.totalorder %s20, 1
      %p85 = por %p83, %p84
      %p87 = scmp.ne.s32.totalorder %s72, %s86
      %p88 = scmp.eq.s32.totalorder %s20, 0
      %p89 = por %p87, %p88
      %s90 = ssub.s32 %s14, %s21
      %p91 = scmp.eq.s32.totalorder %s90, 0
      %s93 = sadd.s32 %s92, 1
      %s94 = scalar_select %p91, %s92, %s93
      %p97 = pneg %p91
      %p98 = scmp.eq.s32.totalorder %s14, 1
      %p99 = por %p97, %p98
      %p100 = scmp.ne.s32.totalorder %s92, %s95
      %p101 = scmp.eq.s32.totalorder %s14, 0
      %p102 = por %p100, %p101
      %p103 = scmp.ne.s32.totalorder %s92, %s95
      %p104 = scmp.eq.s32.totalorder %s19, 1
      %p105 = por %p103, %p104
      %p106 = scmp.ne.s32.totalorder %s95, %s96
      %p107 = scmp.eq.s32.totalorder %s19, 0
      %p108 = por %p106, %p107
      %p109 = scmp.ne.s32.totalorder %s95, %s96
      %p110 = scmp.eq.s32.totalorder %s20, 1
      %p111 = por %p109, %p110
      %p113 = scmp.ne.s32.totalorder %s96, %s112
      %p114 = scmp.eq.s32.totalorder %s20, 0
      %p115 = por %p113, %p114
      %s116 = ssub.s32 %s14, %s21
      %p117 = scmp.eq.s32.totalorder %s116, 0
      %s119 = sadd.s32 %s118, 1
      %s120 = scalar_select %p117, %s118, %s119
      %p123 = pneg %p117
      %p124 = scmp.eq.s32.totalorder %s14, 1
      %p125 = por %p123, %p124
      %p126 = scmp.ne.s32.totalorder %s118, %s121
      %p127 = scmp.eq.s32.totalorder %s14, 0
      %p128 = por %p126, %p127
      %p129 = scmp.ne.s32.totalorder %s118, %s121
      %p130 = scmp.eq.s32.totalorder %s19, 1
      %p131 = por %p129, %p130
      %p132 = scmp.ne.s32.totalorder %s121, %s122
      %p133 = scmp.eq.s32.totalorder %s19, 0
      %p134 = por %p132, %p133
      %p135 = scmp.ne.s32.totalorder %s121, %s122
      %p136 = scmp.eq.s32.totalorder %s20, 1
      %p137 = por %p135, %p136
      %p139 = scmp.ne.s32.totalorder %s122, %s138
      %p140 = scmp.eq.s32.totalorder %s20, 0
      %p141 = por %p139, %p140
      %p142 = scmp.le.s32.totalorder 1, %s14
      %p143 = scmp.lt.s32.totalorder %s14, 3
      %p144 = pnand %p142, %p143
      %p145 = pneg %p144
      // Predicated region
      $region9: #{tpu_custom_call.1} parent=5 // pred_check
        _
      $region10: #{tpu_custom_call.1} parent=5 // pred_check_branch
        %147 = sbr.rel (%p144) target = $region12
      $region11: #{tpu_custom_call.1} parent=5 // pred_region
        %s148 = ssub.s32 %s14, 1
        // Predicated region
        $region13: #{tpu_custom_call.1} parent=11 // pred_check
          %p149 = pneg %p61
        $region14: #{tpu_custom_call.1} parent=11 // pred_check_branch
          %151 = sbr.rel (%p149) target = $region16
        $region15: #{tpu_custom_call.1} parent=11 // pred_region
          %s153 = ssub.s32 512, 512
          %154 = vsyncadd [#allocation3], %s153
          %s155 = sshll.u32 [#allocation2], 4
          %s156 = int_to_ptr.vmem [resolvable:$true] %s155
          %161 = dma.hbm_to_vmem [thread:$0]  %s1, 512, %s156, [#allocation3], 128, 128, 8
        $region16: #{tpu_custom_call.1} parent=11 // pred_fallthru
          _
        // Predicated region
        $region17: #{tpu_custom_call.1} parent=11 // pred_check
          %p162 = pneg %p82
        $region18: #{tpu_custom_call.1} parent=11 // pred_check_branch
          %164 = sbr.rel (%p162) target = $region20
        $region19: #{tpu_custom_call.1} parent=11 // pred_region
          _
        $region20: #{tpu_custom_call.1} parent=11 // pred_fallthru
          _
      $region12: #{tpu_custom_call.1} parent=5 // pred_fallthru
        _
      %p165 = scmp.lt.s32.totalorder %s14, 2
      // Predicated region
      $region21: #{tpu_custom_call.1} parent=5 // pred_check
        %p166 = pneg %p165
      $region22: #{tpu_custom_call.1} parent=5 // pred_check_branch
        %168 = sbr.rel (%p166) target = $region24
      $region23: #{tpu_custom_call.1} parent=5 // pred_region
        // Predicated region
        $region25: #{tpu_custom_call.1} parent=23 // pred_check
          %p169 = pneg %p34
        $region26: #{tpu_custom_call.1} parent=23 // pred_check_branch
          %171 = sbr.rel (%p169) target = $region28
        $region27: #{tpu_custom_call.1} parent=23 // pred_region
          %p172 = scmp.lt.s32.totalorder %s14, 1
          %s173 = scalar_select %p172, %s14, 1
          %s174 = smul.addr %s173, 8
          %s175 = scalar_lea.vmem %s0, %s174
        $region28: #{tpu_custom_call.1} parent=23 // pred_fallthru
          _
        // Predicated region
        $region29: #{tpu_custom_call.1} parent=23 // pred_check
          %p176 = pneg %p102
        $region30: #{tpu_custom_call.1} parent=23 // pred_check_branch
          %178 = sbr.rel (%p176) target = $region32
        $region31: #{tpu_custom_call.1} parent=23 // pred_region
          %p179 = scmp.lt.s32.totalorder %s14, 1
          %s180 = scalar_select %p179, %s14, 1
          %s181 = smul.addr %s180, 8
          %s182 = scalar_lea.vmem %s3, %s181
        $region32: #{tpu_custom_call.1} parent=23 // pred_fallthru
          _
      $region24: #{tpu_custom_call.1} parent=5 // pred_fallthru
        _
      %p183 = scmp.le.s32.totalorder 1, %s14
      %p184 = scmp.lt.s32.totalorder %s14, 3
      %p185 = pnand %p183, %p184
      %p186 = pneg %p185
      // Predicated region
      $region33: #{tpu_custom_call.1} parent=5 // pred_check
        _
      $region34: #{tpu_custom_call.1} parent=5 // pred_check_branch
        %188 = sbr.rel (%p185) target = $region36
      $region35: #{tpu_custom_call.1} parent=5 // pred_region
        %s189 = ssub.s32 %s14, 1
        // Predicated region
        $region37: #{tpu_custom_call.1} parent=35 // pred_check
          %p190 = pneg %p61
        $region38: #{tpu_custom_call.1} parent=35 // pred_check_branch
          %192 = sbr.rel (%p190) target = $region40
        $region39: #{tpu_custom_call.1} parent=35 // pred_region
          %193 = dma.done [#allocation3], 512
        $region40: #{tpu_custom_call.1} parent=35 // pred_fallthru
          _
        %p194 = scmp.lt.s32.totalorder %s19, 1
        %s195 = scalar_select %p194, %s19, 1
        %s196 = smul.addr %s195, 8
        %s197 = scalar_lea.vmem %s0, %s196
        %p198 = pneg %p40
        %p199 = pneg %p37
        %p200 = pneg %p61
        %p201 = pneg %p58
        %p202 = pneg %p82
        %p203 = pneg %p79
        %p204 = scmp.lt.s32.totalorder %s19, 1
        %s205 = scalar_select %p204, %s19, 1
        %s206 = smul.addr %s205, 8
        %s207 = scalar_lea.vmem %s3, %s206
        %p208 = pneg %p108
        %p209 = pneg %p105
        %p210 = pneg %p134
        %p211 = pneg %p131
        %s212 = sand.u32 %s121, 1
        %s213 = scalar_lea.sflag [#allocation4], %s212
        %s214 = sand.u32 %s121, 1
        %s215 = smul.addr %s214, 8
        %s216 = scalar_lea.vmem [#allocation5], %s215
        %p217 = scmp.lt.s32.totalorder %s19, 1
        %s218 = scalar_select %p217, %s19, 1
        %s219 = smul.addr %s218, 8
        %s220 = scalar_lea.vmem %s0, %s219
        %p221 = scmp.lt.s32.totalorder %s19, 1
        %s222 = scalar_select %p221, %s19, 1
        %s223 = smul.addr %s222, 8
        %s224 = scalar_lea.vmem %s3, %s223
        %v225 = vld [vmem:[%s220] sm:$0xff]
        %v226 = vld [vmem:[#allocation2] sm:$0xff]
        %v227 = vld [vmem:[#allocation2 + $0x8] sm:$0xff]
        %v228 = vld [vmem:[#allocation2 + $0x10] sm:$0xff]
        %v229 = vld [vmem:[#allocation2 + $0x18] sm:$0xff]
        %v230 = vld [vmem:[%s2] sm:$0x1]
        %v232 = vlaneseq
        %v233 = vshrl.u32 %v232, 7
        %v234 = vsub.s32 0, %v233
        %v235 = vrot.slane %v230, %v234
        %vm237 = vcmask 261120
        %v239 = vsel %vm237, %v225, 0
        %241 = vmatprep.subr.mxu0 0.0
        %242 = vmatpush1.msra.mxu0 %v226
        %243 = vmatprep.subr.mxu0 0.0
        %244 = vmatpush1.msra.mxu0 %v227
        %245 = vmatprep.subr.mxu0 0.0
        %246 = vmatpush1.msra.mxu0 %v228
        %247 = vmatprep.subr.mxu0 0.0
        %248 = vmatpush1.msra.mxu0 %v229
        %249 = vmatprep.subr.mxu0 0.0
        %250 = vmatpush1.msra.mxu0 0.0
        %251 = vmatprep.subr.mxu0 0.0
        %252 = vmatpush1.msra.mxu0 0.0
        %253 = vmatprep.subr.mxu0 0.0
        %254 = vmatpush1.msra.mxu0 0.0
        %255 = vmatprep.subr.mxu0 0.0
        %256 = vmatpush1.msra.mxu0 0.0
        %257 = vmatprep.subr.mxu0 0.0
        %258 = vmatpush1.msra.mxu0 0.0
        %259 = vmatprep.subr.mxu0 0.0
        %260 = vmatpush1.msra.mxu0 0.0
        %261 = vmatprep.subr.mxu0 0.0
        %262 = vmatpush1.msra.mxu0 0.0
        %263 = vmatprep.subr.mxu0 0.0
        %264 = vmatpush1.msra.mxu0 0.0
        %265 = vmatprep.subr.mxu0 0.0
        %266 = vmatpush1.msra.mxu0 0.0
        %267 = vmatprep.subr.mxu0 0.0
        %268 = vmatpush1.msra.mxu0 0.0
        %269 = vmatprep.subr.mxu0 0.0
        %270 = vmatpush1.msra.mxu0 0.0
        %271 = vmatprep.subr.mxu0 0.0
        %272 = vmatpush1.msra.mxu0 0.0
        %273 = vmatprep.subr.mxu0 0.0
        %274 = vmatpush1.msra.mxu0 0.0
        %275 = vmatprep.subr.mxu0 0.0
        %276 = vmatpush1.msra.mxu0 0.0
        %277 = vmatprep.subr.mxu0 0.0
        %278 = vmatpush1.msra.mxu0 0.0
        %279 = vmatprep.subr.mxu0 0.0
        %280 = vmatpush1.msra.mxu0 0.0
        %281 = vmatprep.subr.mxu0 0.0
        %282 = vmatpush1.msra.mxu0 0.0
        %283 = vmatprep.subr.mxu0 0.0
        %284 = vmatpush1.msra.mxu0 0.0
        %285 = vmatprep.subr.mxu0 0.0
        %286 = vmatpush1.msra.mxu0 0.0
        %287 = vmatprep.subr.mxu0 0.0
        %288 = vmatpush1.msra.mxu0 0.0
        %289 = vmatprep.subr.mxu0 0.0
        %290 = vmatpush1.msra.mxu0 0.0
        %291 = vmatprep.subr.mxu0 0.0
        %292 = vmatpush1.msra.mxu0 0.0
        %293 = vmatprep.subr.mxu0 0.0
        %294 = vmatpush1.msra.mxu0 0.0
        %295 = vmatprep.subr.mxu0 0.0
        %296 = vmatpush1.msra.mxu0 0.0
        %297 = vmatprep.subr.mxu0 0.0
        %298 = vmatpush1.msra.mxu0 0.0
        %299 = vmatprep.subr.mxu0 0.0
        %300 = vmatpush1.msra.mxu0 0.0
        %301 = vmatprep.subr.mxu0 0.0
        %302 = vmatpush1.msra.mxu0 0.0
        %303 = vmatprep.subr.mxu0 0.0
        %304 = vmatpush1.msra.mxu0 0.0
        %305 = vmatprep.mubr.f32.mxu0 0.0
        %306 = vmatmul.mubr.f32.gmra.mrb[0].mxu0 %v239
        %v307 = vpop.f32.mrb[0].mxu0
        %v308 = vadd.f32 %v235, %v307
        %v309 = vpop.f32.mrb[0].mxu0
        %310 = vdwg.mxu0
        %vm311 = vcmp.gt.f32.partialorder %v308, 0.0
        %v312 = vmul.f32 %v308, 0.01
        %v313 = vsel %vm311, %v308, %v312
        %v314 = vld [vmem:[%s224] sm:$0xff]
        %316 = vset.pattern.permute.xlu0 0
        %317 = vperm.xlu0 %316, %v314
        %v318 = vpop.permute.xlu0 %317
        %v320 = vmul.f32 %v313, %v318
        %321 = vst [vmem:[%s216] sm:$0xff] %v320
        %s322 = sand.u32 %s121, 1
        %s323 = scalar_lea.sflag [#allocation4], %s322
        %s324 = sand.u32 %s121, 1
        %s325 = smul.addr %s324, 8
        %s326 = scalar_lea.vmem [#allocation5], %s325
        // Predicated region
        $region41: #{tpu_custom_call.1} parent=35 // pred_check
          %p327 = pneg %p131
        $region42: #{tpu_custom_call.1} parent=35 // pred_check_branch
          %329 = sbr.rel (%p327) target = $region44
        $region43: #{tpu_custom_call.1} parent=35 // pred_region
          %s331 = ssub.s32 128, 128
          %332 = vsyncadd %s323, %s331
          %s333 = smul.addr %s19, 128
          %s334 = scalar_lea.hbm %s4, %s333
          %s336 = sshll.u32 %s326, 4
          %s337 = int_to_ptr.vmem [resolvable:$true] %s336
          %339 = dma.vmem_to_hbm [thread:$0]  %s337, 128, %s334, %s323
        $region44: #{tpu_custom_call.1} parent=35 // pred_fallthru
          _
      $region36: #{tpu_custom_call.1} parent=5 // pred_fallthru
        _
      %p340 = scmp.le.s32.totalorder 2, %s14
      // Predicated region
      $region45: #{tpu_custom_call.1} parent=5 // pred_check
        %p341 = pneg %p340
      $region46: #{tpu_custom_call.1} parent=5 // pred_check_branch
        %343 = sbr.rel (%p341) target = $region48
      $region47: #{tpu_custom_call.1} parent=5 // pred_region
        %s344 = ssub.s32 %s14, 2
        // Predicated region
        $region49: #{tpu_custom_call.1} parent=47 // pred_check
          %p345 = pneg %p137
        $region50: #{tpu_custom_call.1} parent=47 // pred_check_branch
          %347 = sbr.rel (%p345) target = $region52
        $region51: #{tpu_custom_call.1} parent=47 // pred_region
          %s348 = sand.u32 %s122, 1
          %s349 = scalar_lea.sflag [#allocation4], %s348
          %s350 = sand.u32 %s122, 1
          %s351 = smul.addr %s350, 8
          %s352 = scalar_lea.vmem [#allocation5], %s351
          %353 = dma.done %s349, 128
        $region52: #{tpu_custom_call.1} parent=47 // pred_fallthru
          _
      $region48: #{tpu_custom_call.1} parent=5 // pred_fallthru
        _
    $region6: #{tpu_custom_call.1} parent=1 // loop_footer
      %s18 = sadd.s32 1, %s14
    $region7: #{tpu_custom_call.1} parent=1 // loop_footer_branch
      %13 = sbr.rel target = $region3
    $region8: #{tpu_custom_call.1} parent=1 // loop_exit
      _
    %354 = vsyncpa [#allocation3], 1
    %s355 = scalar_lea.sflag [#allocation3], 1
    %356 = vsyncpa %s355, 1
    %357 = vsyncpa [#allocation4], 1
    %s358 = scalar_lea.sflag [#allocation4], 1
    %359 = vsyncpa %s358, 1

</llo_original>
